<compile_context>
chip_gen: v5e
topology: v5e:2x2
jax: 0.10.0
libtpu: 0.0.40
codegen_flags: <defaults>
</compile_context>

<pallas_src>
import jax
import jax.numpy as jnp
from jax.experimental import pallas as pl
from jax.experimental.pallas import tpu as pltpu

_LANES = 1024      # slab last dim (multiple of 128 -> unmasked full-width vst)
_ROW_BLOCK = 256   # rows per grid step -> 256*1024*4B = 1 MiB f32 per input block


def _bce_kernel(p_ref, g_ref, v_ref, o_ref):
    p = p_ref[...].astype(jnp.float32)
    g = g_ref[...].astype(jnp.float32)
    v = v_ref[...].astype(jnp.float32)
    # PyTorch BCELoss clamps each log term at -100 to avoid -inf.
    log_p = jnp.maximum(jnp.log(p), -100.0)
    log_1mp = jnp.maximum(jnp.log(1.0 - p), -100.0)
    loss = -(g * log_p + (1.0 - g) * log_1mp)
    o_ref[...] = (loss * v).astype(o_ref.dtype)


def bce_loss(prob_in, prob_gt, valid):
    """Elementwise BCE(prob_in, prob_gt) * valid, reduction='none' (NCHW in/out)."""
    assert prob_in.shape == prob_gt.shape == valid.shape
    orig_shape = prob_in.shape
    out_dtype = prob_in.dtype
    total = prob_in.size

    rows_raw = -(-total // _LANES)  # ceil-div
    if rows_raw <= _ROW_BLOCK:
        # Single block covering the full row extent (block == full array dims,
        # so no (8,128) divisibility requirement and no row padding needed).
        rows = rows_raw
        row_block = rows_raw
    else:
        # Tiled path: rows rounded up to the sublane tile (8); grid uses cdiv so
        # the last block may be partial (Pallas masks edge blocks).
        rows = ((rows_raw + 7) // 8) * 8
        row_block = _ROW_BLOCK
    padded_total = rows * _LANES

    def to_slab(x):
        flat = x.reshape(-1)
        if padded_total != total:
            # pad value 0 is numerically benign here (gt=0, valid=0 -> loss*valid=0),
            # and the padded tail is discarded anyway.
            flat = jnp.pad(flat, (0, padded_total - total))
        return flat.reshape(rows, _LANES)

    p2 = to_slab(prob_in)
    g2 = to_slab(prob_gt)
    v2 = to_slab(valid)

    grid = (-(-rows // row_block),)
    spec = pl.BlockSpec((row_block, _LANES), lambda i: (i, 0))

    out = pl.pallas_call(
        _bce_kernel,
        out_shape=jax.ShapeDtypeStruct((rows, _LANES), out_dtype),
        grid=grid,
        in_specs=[spec, spec, spec],
        out_specs=spec,
        compiler_params=pltpu.CompilerParams(
            dimension_semantics=("parallel",)
        ),
    )(p2, g2, v2)

    out = out.reshape(-1)
    if padded_total != total:
        out = out[:total]
    return out.reshape(orig_shape)


def _reference(prob_in, prob_gt, valid):
    p = prob_in.astype(jnp.float32)
    g = prob_gt.astype(jnp.float32)
    v = valid.astype(jnp.float32)
    log_p = jnp.maximum(jnp.log(p), -100.0)
    log_1mp = jnp.maximum(jnp.log(1.0 - p), -100.0)
    return (-(g * log_p + (1.0 - g) * log_1mp) * v).astype(prob_in.dtype)


def _make_inputs(key, shape):
    k1, k2, k3 = jax.random.split(key, 3)
    prob_in = jax.random.uniform(k1, shape, jnp.float32, minval=1e-4, maxval=1.0 - 1e-4)
    prob_gt = (jax.random.uniform(k2, shape, jnp.float32) > 0.5).astype(jnp.float32)
    valid = (jax.random.uniform(k3, shape, jnp.float32) > 0.3).astype(jnp.float32)
    return prob_in, prob_gt, valid


if __name__ == "__main__":
    key = jax.random.PRNGKey(0)
    keys = jax.random.split(key, 3)

    # NCHW layouts, same as PyTorch.  Cases exercise:
    #   (2,4,16,16)   -> single-block path, no padding (2048 = 2*1024)
    #   (2,3,17,19)   -> single-block path with lane padding (1938 -> 2048)
    #   (4,8,128,128) -> multi-block tiled path (512 rows, grid of 2)
    shapes = [(2, 4, 16, 16), (2, 3, 17, 19), (4, 8, 128, 128)]

    for k, shape in zip(keys, shapes):
        prob_in, prob_gt, valid = _make_inputs(k, shape)
        out = bce_loss(prob_in, prob_gt, valid)
        jax.block_until_ready(out)
        ref = _reference(prob_in, prob_gt, valid)
        assert out.shape == shape
        assert jnp.allclose(out, ref, atol=1e-5, rtol=1e-5), f"mismatch at {shape}"

    print("KERNEL_OK")
</pallas_src>

<mosaic_0001>
module attributes {stable_mosaic.version = 11 : i64} {
  func.func @_bce_kernel(%arg0: i32, %arg1: memref<2x1024xf32, #tpu.memory_space<vmem>>, %arg2: memref<2x1024xf32, #tpu.memory_space<vmem>>, %arg3: memref<2x1024xf32, #tpu.memory_space<vmem>>, %arg4: memref<2x1024xf32, #tpu.memory_space<vmem>>) attributes {dimension_semantics = [#tpu.dimension_semantics<parallel>], iteration_bounds = array<i64: 1>, scalar_prefetch = 0 : i64, scratch_operands = 0 : i64, tpu.core_type = #tpu.core_type<tc>, window_params = [{transform_indices = @transform_0, window_bounds = array<i64: 2, 1024>}, {transform_indices = @transform_1, window_bounds = array<i64: 2, 1024>}, {transform_indices = @transform_2, window_bounds = array<i64: 2, 1024>}, {transform_indices = @transform_3, window_bounds = array<i64: 2, 1024>}]} {
    %c0 = arith.constant 0 : index
    %c0_0 = arith.constant 0 : index
    %0 = vector.load %arg1[%c0, %c0_0] : memref<2x1024xf32, #tpu.memory_space<vmem>>, vector<2x1024xf32>
    %c0_1 = arith.constant 0 : index
    %c0_2 = arith.constant 0 : index
    %1 = vector.load %arg2[%c0_1, %c0_2] : memref<2x1024xf32, #tpu.memory_space<vmem>>, vector<2x1024xf32>
    %c0_3 = arith.constant 0 : index
    %c0_4 = arith.constant 0 : index
    %2 = vector.load %arg3[%c0_3, %c0_4] : memref<2x1024xf32, #tpu.memory_space<vmem>>, vector<2x1024xf32>
    %3 = math.log %0 : vector<2x1024xf32>
    %cst = arith.constant -1.000000e+02 : f32
    %4 = vector.broadcast %cst : f32 to vector<2x1024xf32>
    %5 = arith.maximumf %3, %4 : vector<2x1024xf32>
    %cst_5 = arith.constant 1.000000e+00 : f32
    %6 = vector.broadcast %cst_5 : f32 to vector<2x1024xf32>
    %7 = arith.subf %6, %0 : vector<2x1024xf32>
    %8 = math.log %7 : vector<2x1024xf32>
    %cst_6 = arith.constant -1.000000e+02 : f32
    %9 = vector.broadcast %cst_6 : f32 to vector<2x1024xf32>
    %10 = arith.maximumf %8, %9 : vector<2x1024xf32>
    %11 = arith.mulf %1, %5 : vector<2x1024xf32>
    %cst_7 = arith.constant 1.000000e+00 : f32
    %12 = vector.broadcast %cst_7 : f32 to vector<2x1024xf32>
    %13 = arith.subf %12, %1 : vector<2x1024xf32>
    %14 = arith.mulf %13, %10 : vector<2x1024xf32>
    %15 = arith.addf %11, %14 : vector<2x1024xf32>
    %cst_8 = arith.constant 0.000000e+00 : f32
    %16 = vector.broadcast %cst_8 : f32 to vector<2x1024xf32>
    %17 = arith.subf %16, %15 : vector<2x1024xf32>
    %18 = arith.mulf %17, %2 : vector<2x1024xf32>
    %c0_9 = arith.constant 0 : index
    %c0_10 = arith.constant 0 : index
    %19 = vector.load %arg4[%c0_9, %c0_10] : memref<2x1024xf32, #tpu.memory_space<vmem>>, vector<2x1024xf32>
    tpu.vector_store %arg4[%c0_9, %c0_10], %18 {strides = array<i32>} : memref<2x1024xf32, #tpu.memory_space<vmem>>, vector<2x1024xf32>,
    return
  }
  func.func @transform_0(%arg0: i32) -> (i32, i32) {
    %c0_i32 = arith.constant 0 : i32
    %c0_i32_0 = arith.constant 0 : i32
    return %arg0, %c0_i32 : i32, i32
  }
  func.func @transform_1(%arg0: i32) -> (i32, i32) {
    %c0_i32 = arith.constant 0 : i32
    %c0_i32_0 = arith.constant 0 : i32
    return %arg0, %c0_i32 : i32, i32
  }
  func.func @transform_2(%arg0: i32) -> (i32, i32) {
    %c0_i32 = arith.constant 0 : i32
    %c0_i32_0 = arith.constant 0 : i32
    return %arg0, %c0_i32 : i32, i32
  }
  func.func @transform_3(%arg0: i32) -> (i32, i32) {
    %c0_i32 = arith.constant 0 : i32
    %c0_i32_0 = arith.constant 0 : i32
    return %arg0, %c0_i32 : i32, i32
  }
}

</mosaic_0001>

<llo_original>
// kernel: tpu_custom_call.1
$region0: #{tpu_custom_call.1}
  #allocation0 [shape = 'u32[]', space=smem, size = 0x4, offset = 0x4, fixed_abs, tag = 'smem constant byte address 0x4 - core index']
  #allocation1 [shape = 'u32[72,128]{1,0:T(1,128)}', space=vmem, size = 0x9000, scoped, tag = 'internal scratch']
  %s0 = inlined_call_operand.hbm [shape: f32[2,1024], index: 0, kind: input, shape index: {}]
  %s1 = inlined_call_operand.hbm [shape: f32[2,1024], index: 1, kind: input, shape index: {}]
  %s2 = inlined_call_operand.hbm [shape: f32[2,1024], index: 2, kind: input, shape index: {}]
  %s3 = inlined_call_operand.hbm [shape: f32[2,1024], index: 3, kind: output, shape index: {}]
  %s4 = sld [smem:[#allocation0]]
  $region34: #{tpu_custom_call.1} parent=0
    _
  %s6 = ssub.s32 1, %s4
  %s7 = scalar_select 0, %s6, %s4
  $region1: #{tpu_custom_call.1} parent=0
    #allocation2 [shape = 'u8[8192]{0}', space=vmem, size = 0x2000, scoped, tag = 'input window, operand 0, single buffered']
    #allocation3 [shape = 's32[1]{0}', space=sflag, size = 0x4, scoped, tag = 'scoped memory for tpu_custom_call.1']
    #allocation4 [shape = 's32[1]{0}', space=sflag, size = 0x4, scoped, tag = 'scoped memory for tpu_custom_call.1']
    #allocation5 [shape = 'u8[8192]{0}', space=vmem, size = 0x2000, scoped, tag = 'input window, operand 1, single buffered']
    #allocation6 [shape = 's32[1]{0}', space=sflag, size = 0x4, scoped, tag = 'scoped memory for tpu_custom_call.1']
    #allocation7 [shape = 'u8[8192]{0}', space=vmem, size = 0x2000, scoped, tag = 'input window, operand 2, single buffered']
    #allocation8 [shape = 'u8[8192]{0}', space=vmem, size = 0x2000, scoped, tag = 'output window, operand 0, single buffered']
    %8 = vsyncpa [#allocation3], 0
    %9 = vsyncpa [#allocation6], 0
    %10 = vsyncpa [#allocation4], 0
    // Predicated region
    $region2: #{tpu_custom_call.1} parent=1 // pred_check
      _
    $region3: #{tpu_custom_call.1} parent=1 // pred_check_branch
      %12 = sbr.rel (0) target = $region5
    $region4: #{tpu_custom_call.1} parent=1 // pred_region
      %14 = vsyncadd [#allocation3], 0
      %s16 = sshll.u32 %s0, 4
      %s17 = int_to_ptr.hbm [resolvable:$true] %s16
      %s18 = sshll.u32 [#allocation2], 4
      %s19 = int_to_ptr.vmem [resolvable:$true] %s18
      %21 = dma.hbm_to_vmem [thread:$0]  %s17, 256, %s19, [#allocation3]
    $region5: #{tpu_custom_call.1} parent=1 // pred_fallthru
      _
    // Predicated region
    $region6: #{tpu_custom_call.1} parent=1 // pred_check
      _
    $region7: #{tpu_custom_call.1} parent=1 // pred_check_branch
      %23 = sbr.rel (0) target = $region9
    $region8: #{tpu_custom_call.1} parent=1 // pred_region
      %25 = vsyncadd [#allocation6], 0
      %s27 = sshll.u32 %s1, 4
      %s28 = int_to_ptr.hbm [resolvable:$true] %s27
      %s29 = sshll.u32 [#allocation5], 4
      %s30 = int_to_ptr.vmem [resolvable:$true] %s29
      %32 = dma.hbm_to_vmem [thread:$0]  %s28, 256, %s30, [#allocation6]
    $region9: #{tpu_custom_call.1} parent=1 // pred_fallthru
      _
    // Predicated region
    $region10: #{tpu_custom_call.1} parent=1 // pred_check
      _
    $region11: #{tpu_custom_call.1} parent=1 // pred_check_branch
      %34 = sbr.rel (0) target = $region13
    $region12: #{tpu_custom_call.1} parent=1 // pred_region
      %36 = vsyncadd [#allocation6], 0
      %s38 = sshll.u32 %s2, 4
      %s39 = int_to_ptr.hbm [resolvable:$true] %s38
      %s40 = sshll.u32 [#allocation7], 4
      %s41 = int_to_ptr.vmem [resolvable:$true] %s40
      %43 = dma.hbm_to_vmem [thread:$0]  %s39, 256, %s41, [#allocation6]
    $region13: #{tpu_custom_call.1} parent=1 // pred_fallthru
      _
    // Predicated region
    $region14: #{tpu_custom_call.1} parent=1 // pred_check
      _
    $region15: #{tpu_custom_call.1} parent=1 // pred_check_branch
      %45 = sbr.rel (0) target = $region17
    $region16: #{tpu_custom_call.1} parent=1 // pred_region
      %47 = dma.done [#allocation3], 256
    $region17: #{tpu_custom_call.1} parent=1 // pred_fallthru
      _
    // Predicated region
    $region18: #{tpu_custom_call.1} parent=1 // pred_check
      _
    $region19: #{tpu_custom_call.1} parent=1 // pred_check_branch
      %49 = sbr.rel (0) target = $region21
    $region20: #{tpu_custom_call.1} parent=1 // pred_region
      %51 = dma.done [#allocation6], 256
    $region21: #{tpu_custom_call.1} parent=1 // pred_fallthru
      _
    // Predicated region
    $region22: #{tpu_custom_call.1} parent=1 // pred_check
      _
    $region23: #{tpu_custom_call.1} parent=1 // pred_check_branch
      %53 = sbr.rel (0) target = $region25
    $region24: #{tpu_custom_call.1} parent=1 // pred_region
      %55 = dma.done [#allocation6], 256
    $region25: #{tpu_custom_call.1} parent=1 // pred_fallthru
      _
    %v56 = vld [vmem:[#allocation2] sm:$0xff]
    %v57 = vld [vmem:[#allocation2 + $0x8] sm:$0xff]
    %v58 = vld [vmem:[#allocation5] sm:$0xff]
    %v59 = vld [vmem:[#allocation5 + $0x8] sm:$0xff]
    %v60 = vld [vmem:[#allocation7] sm:$0xff]
    %v61 = vld [vmem:[#allocation7 + $0x8] sm:$0xff]
    %v62 = vlog2.pop %v56
    %v63 = vmul.f32 %v62, 0.6931472
    %v64 = vlog2.pop %v57
    %v65 = vmul.f32 %v64, 0.6931472
    %v66 = vmax.f32 %v63, -100.0
    %v67 = vmax.f32 %v65, -100.0
    %v68 = vsub.f32 1.0, %v56
    %v69 = vsub.f32 1.0, %v57
    %v70 = vlog2.pop %v68
    %v71 = vmul.f32 %v70, 0.6931472
    %v72 = vlog2.pop %v69
    %v73 = vmul.f32 %v72, 0.6931472
    %v74 = vmax.f32 %v71, -100.0
    %v75 = vmax.f32 %v73, -100.0
    %v76 = vmul.f32 %v58, %v66
    %v77 = vmul.f32 %v59, %v67
    %v78 = vsub.f32 1.0, %v58
    %v79 = vsub.f32 1.0, %v59
    %v80 = vmul.f32 %v78, %v74
    %v81 = vmul.f32 %v79, %v75
    %v82 = vadd.f32 %v76, %v80
    %v83 = vadd.f32 %v77, %v81
    %v84 = vsub.f32 0.0, %v82
    %v85 = vsub.f32 0.0, %v83
    %v86 = vmul.f32 %v84, %v60
    %v87 = vmul.f32 %v85, %v61
    %88 = vst [vmem:[#allocation8] sm:$0xff] %v86
    %89 = vst [vmem:[#allocation8 + $0x8] sm:$0xff] %v87
    // Predicated region
    $region26: #{tpu_custom_call.1} parent=1 // pred_check
      _
    $region27: #{tpu_custom_call.1} parent=1 // pred_check_branch
      %91 = sbr.rel (0) target = $region29
    $region28: #{tpu_custom_call.1} parent=1 // pred_region
      %93 = vsyncadd [#allocation4], 0
      %s95 = sshll.u32 [#allocation8], 4
      %s96 = int_to_ptr.vmem [resolvable:$true] %s95
      %s97 = sshll.u32 %s3, 4
      %s98 = int_to_ptr.hbm [resolvable:$true] %s97
      %100 = dma.vmem_to_hbm [thread:$0]  %s96, 256, %s98, [#allocation4]
    $region29: #{tpu_custom_call.1} parent=1 // pred_fallthru
      _
    // Predicated region
    $region30: #{tpu_custom_call.1} parent=1 // pred_check
      _
    $region31: #{tpu_custom_call.1} parent=1 // pred_check_branch
      %102 = sbr.rel (0) target = $region33
    $region32: #{tpu_custom_call.1} parent=1 // pred_region
      %104 = dma.done [#allocation4], 256
    $region33: #{tpu_custom_call.1} parent=1 // pred_fallthru
      _
    %105 = vsyncpa [#allocation3], 1
    %106 = vsyncpa [#allocation6], 1
    %107 = vsyncpa [#allocation4], 1

</llo_original>
